<compile_context>
chip_gen: v5e
topology: v5e:2x2
jax: 0.10.0
libtpu: 0.0.40
codegen_flags: <defaults>
</compile_context>

<pallas_src>
import functools

import jax
import jax.numpy as jnp
from jax.experimental import pallas as pl
from jax.experimental.pallas import tpu as pltpu


_LANE_WIDTH = 512      # lane-dense block width (multiple of 128)
_MAX_TILE_ROWS = 512   # rows per block -> up to ~1 MiB f32 payload per stream


def _round_up(a, b):
    return (a + b - 1) // b * b


def _stable_dropout_kernel(x_ref, bits_ref, o_ref, *, threshold, scale):
    # Keep an element with prob (1 - drop_prob): uniform uint32 >= p * 2^32.
    keep = bits_ref[...] >= jnp.uint32(threshold)
    scaled = x_ref[...] * jnp.asarray(scale, x_ref.dtype)
    o_ref[...] = jnp.where(keep, scaled, jnp.zeros_like(scaled))


def stable_dropout(x, drop_prob, seed, *, training=True):
    """Pallas implementation of StableDropout.forward.

    Eval mode (or drop_prob == 0) is an exact identity, matching the PyTorch
    module.  Training mode applies the Bernoulli drop mask (masked-fill with 0)
    followed by the 1/(1-p) rescale, exactly like XDropout.forward.
    """
    if (not training) or drop_prob <= 0.0:
        return x

    orig_shape = x.shape
    dtype = x.dtype
    flat = x.reshape(-1)
    n = flat.shape[0]

    # Lane-dense retiling: (rows_pad, W) with W a large multiple of 128.
    W = _LANE_WIDTH
    rows = -(-n // W)
    tile_m = min(_MAX_TILE_ROWS, _round_up(rows, 16))   # mult of 16: f32 & bf16 safe
    rows_pad = _round_up(rows, tile_m)
    n_pad = rows_pad * W

    xp = jnp.pad(flat, (0, n_pad - n)) if n_pad != n else flat
    x2 = xp.reshape(rows_pad, W)

    # Uniform uint32 bits for the whole (padded) tensor.
    key = jax.random.PRNGKey(seed)
    bits2 = jax.random.bits(key, (rows_pad, W), dtype=jnp.uint32)

    # Integer threshold: drop iff bits < drop_prob * 2^32.
    threshold = min((1 << 32) - 1, int(round(float(drop_prob) * float(1 << 32))))
    scale = 1.0 / (1.0 - float(drop_prob))

    kernel = functools.partial(
        _stable_dropout_kernel, threshold=threshold, scale=scale
    )

    out2 = pl.pallas_call(
        kernel,
        out_shape=jax.ShapeDtypeStruct((rows_pad, W), dtype),
        grid=(rows_pad // tile_m,),
        in_specs=[
            pl.BlockSpec((tile_m, W), lambda i: (i, 0)),
            pl.BlockSpec((tile_m, W), lambda i: (i, 0)),
        ],
        out_specs=pl.BlockSpec((tile_m, W), lambda i: (i, 0)),
        compiler_params=pltpu.CompilerParams(
            # Tiles are fully independent -> megacore (v7x) may shard the grid.
            dimension_semantics=("parallel",),
        ),
    )(x2, bits2)

    return out2.reshape(-1)[:n].reshape(orig_shape)


if __name__ == "__main__":
    # StableDropout has no learnable parameters; only drop_prob.
    drop_prob = 0.1
    batch, seq, hidden = 2, 8, 32  # typical (B, S, H) activation shape

    key = jax.random.PRNGKey(0)
    x = jax.random.normal(key, (batch, seq, hidden), dtype=jnp.float32)

    # Training-mode forward (dropout applied in the Pallas kernel).
    y_train = stable_dropout(x, drop_prob, seed=1234, training=True)
    y_train = jax.block_until_ready(y_train)

    # Eval-mode forward (identity, exactly like the PyTorch module).
    y_eval = stable_dropout(x, drop_prob, seed=1234, training=False)
    y_eval = jax.block_until_ready(y_eval)

    # Sanity checks on the semantics.
    assert y_train.shape == x.shape and y_train.dtype == x.dtype
    assert jnp.array_equal(y_eval, x)
    scale = 1.0 / (1.0 - drop_prob)
    nonzero = y_train != 0.0
    # Every surviving element must equal x * 1/(1-p).
    assert jnp.allclose(
        jnp.where(nonzero, y_train, 0.0),
        jnp.where(nonzero, x * scale, 0.0),
        rtol=1e-5,
        atol=1e-5,
    )

    print("KERNEL_OK")
</pallas_src>

<mosaic_0001>
module attributes {stable_mosaic.version = 11 : i64} {
  func.func @_stable_dropout_kernel(%arg0: i32, %arg1: memref<16x512xf32, #tpu.memory_space<vmem>>, %arg2: memref<16x512xi32, #tpu.memory_space<vmem>>, %arg3: memref<16x512xf32, #tpu.memory_space<vmem>>) attributes {dimension_semantics = [#tpu.dimension_semantics<parallel>], iteration_bounds = array<i64: 1>, scalar_prefetch = 0 : i64, scratch_operands = 0 : i64, tpu.core_type = #tpu.core_type<tc>, window_params = [{transform_indices = @transform_0, window_bounds = array<i64: 16, 512>}, {transform_indices = @transform_1, window_bounds = array<i64: 16, 512>}, {transform_indices = @transform_2, window_bounds = array<i64: 16, 512>}]} {
    %c0 = arith.constant 0 : index
    %c0_0 = arith.constant 0 : index
    %0 = vector.load %arg2[%c0, %c0_0] : memref<16x512xi32, #tpu.memory_space<vmem>>, vector<16x512xi32>
    %c429496730_i32 = arith.constant 429496730 : i32
    %1 = vector.broadcast %c429496730_i32 : i32 to vector<16x512xi32>
    %2 = arith.cmpi uge, %0, %1 : vector<16x512xi32>
    %c0_1 = arith.constant 0 : index
    %c0_2 = arith.constant 0 : index
    %3 = vector.load %arg1[%c0_1, %c0_2] : memref<16x512xf32, #tpu.memory_space<vmem>>, vector<16x512xf32>
    %cst = arith.constant 1.11111116 : f32
    %4 = vector.broadcast %cst : f32 to vector<16x512xf32>
    %5 = arith.mulf %3, %4 : vector<16x512xf32>
    %cst_3 = arith.constant 0.000000e+00 : f32
    %6 = vector.broadcast %cst_3 : f32 to vector<16x512xf32>
    %7 = arith.select %2, %5, %6 : vector<16x512xi1>, vector<16x512xf32>
    %c0_4 = arith.constant 0 : index
    %c0_5 = arith.constant 0 : index
    %8 = vector.load %arg3[%c0_4, %c0_5] : memref<16x512xf32, #tpu.memory_space<vmem>>, vector<16x512xf32>
    tpu.vector_store %arg3[%c0_4, %c0_5], %7 {strides = array<i32>} : memref<16x512xf32, #tpu.memory_space<vmem>>, vector<16x512xf32>,
    return
  }
  func.func @transform_0(%arg0: i32) -> (i32, i32) {
    %c0_i32 = arith.constant 0 : i32
    %c0_i32_0 = arith.constant 0 : i32
    return %arg0, %c0_i32 : i32, i32
  }
  func.func @transform_1(%arg0: i32) -> (i32, i32) {
    %c0_i32 = arith.constant 0 : i32
    %c0_i32_0 = arith.constant 0 : i32
    return %arg0, %c0_i32 : i32, i32
  }
  func.func @transform_2(%arg0: i32) -> (i32, i32) {
    %c0_i32 = arith.constant 0 : i32
    %c0_i32_0 = arith.constant 0 : i32
    return %arg0, %c0_i32 : i32, i32
  }
}

</mosaic_0001>

<llo_original>
// kernel: tpu_custom_call.1
$region0: #{tpu_custom_call.1}
  #allocation0 [shape = 'u32[]', space=smem, size = 0x4, offset = 0x4, fixed_abs, tag = 'smem constant byte address 0x4 - core index']
  #allocation1 [shape = 'u32[72,128]{1,0:T(1,128)}', space=vmem, size = 0x9000, scoped, tag = 'internal scratch']
  %s0 = inlined_call_operand.hbm [shape: f32[16,512], index: 0, kind: input, shape index: {}]
  %s1 = inlined_call_operand.hbm [shape: u32[16,512], index: 1, kind: input, shape index: {}]
  %s2 = inlined_call_operand.hbm [shape: f32[16,512], index: 2, kind: output, shape index: {}]
  %s3 = sld [smem:[#allocation0]]
  $region26: #{tpu_custom_call.1} parent=0
    _
  %s5 = ssub.s32 1, %s3
  %s6 = scalar_select 0, %s5, %s3
  $region1: #{tpu_custom_call.1} parent=0
    #allocation2 [shape = 'u8[32768]{0}', space=vmem, size = 0x8000, scoped, tag = 'input window, operand 0, single buffered']
    #allocation3 [shape = 's32[1]{0}', space=sflag, size = 0x4, scoped, tag = 'scoped memory for tpu_custom_call.1']
    #allocation4 [shape = 's32[1]{0}', space=sflag, size = 0x4, scoped, tag = 'scoped memory for tpu_custom_call.1']
    #allocation5 [shape = 'u8[32768]{0}', space=vmem, size = 0x8000, scoped, tag = 'input window, operand 1, single buffered']
    #allocation6 [shape = 's32[1]{0}', space=sflag, size = 0x4, scoped, tag = 'scoped memory for tpu_custom_call.1']
    #allocation7 [shape = 'u8[32768]{0}', space=vmem, size = 0x8000, scoped, tag = 'output window, operand 0, single buffered']
    %7 = vsyncpa [#allocation3], 0
    %8 = vsyncpa [#allocation6], 0
    %9 = vsyncpa [#allocation4], 0
    // Predicated region
    $region2: #{tpu_custom_call.1} parent=1 // pred_check
      _
    $region3: #{tpu_custom_call.1} parent=1 // pred_check_branch
      %11 = sbr.rel (0) target = $region5
    $region4: #{tpu_custom_call.1} parent=1 // pred_region
      %13 = vsyncadd [#allocation3], 0
      %s14 = sshll.u32 %s0, 4
      %s15 = int_to_ptr.hbm [resolvable:$true] %s14
      %s16 = sshll.u32 [#allocation2], 4
      %s17 = int_to_ptr.vmem [resolvable:$true] %s16
      %22 = dma.hbm_to_vmem [thread:$0]  %s15, 1024, %s17, [#allocation3], 512, 512, 32
    $region5: #{tpu_custom_call.1} parent=1 // pred_fallthru
      _
    // Predicated region
    $region6: #{tpu_custom_call.1} parent=1 // pred_check
      _
    $region7: #{tpu_custom_call.1} parent=1 // pred_check_branch
      %24 = sbr.rel (0) target = $region9
    $region8: #{tpu_custom_call.1} parent=1 // pred_region
      %26 = vsyncadd [#allocation6], 0
      %s27 = sshll.u32 %s1, 4
      %s28 = int_to_ptr.hbm [resolvable:$true] %s27
      %s29 = sshll.u32 [#allocation5], 4
      %s30 = int_to_ptr.vmem [resolvable:$true] %s29
      %35 = dma.hbm_to_vmem [thread:$0]  %s28, 1024, %s30, [#allocation6], 512, 512, 32
    $region9: #{tpu_custom_call.1} parent=1 // pred_fallthru
      _
    // Predicated region
    $region10: #{tpu_custom_call.1} parent=1 // pred_check
      _
    $region11: #{tpu_custom_call.1} parent=1 // pred_check_branch
      %37 = sbr.rel (0) target = $region13
    $region12: #{tpu_custom_call.1} parent=1 // pred_region
      %39 = dma.done [#allocation3], 1024
    $region13: #{tpu_custom_call.1} parent=1 // pred_fallthru
      _
    // Predicated region
    $region14: #{tpu_custom_call.1} parent=1 // pred_check
      _
    $region15: #{tpu_custom_call.1} parent=1 // pred_check_branch
      %41 = sbr.rel (0) target = $region17
    $region16: #{tpu_custom_call.1} parent=1 // pred_region
      %43 = dma.done [#allocation6], 1024
    $region17: #{tpu_custom_call.1} parent=1 // pred_fallthru
      _
    %v44 = vld [vmem:[#allocation5] sm:$0xff]
    %v45 = vld [vmem:[#allocation5 + $0x8] sm:$0xff]
    %v46 = vld [vmem:[#allocation5 + $0x10] sm:$0xff]
    %v47 = vld [vmem:[#allocation5 + $0x18] sm:$0xff]
    %v48 = vld [vmem:[#allocation5 + $0x20] sm:$0xff]
    %v49 = vld [vmem:[#allocation5 + $0x28] sm:$0xff]
    %v50 = vld [vmem:[#allocation5 + $0x30] sm:$0xff]
    %v51 = vld [vmem:[#allocation5 + $0x38] sm:$0xff]
    %v52 = vadd.s32 %v44, 2147483648
    %vm54 = vcmp.ge.s32.totalorder %v52, 2576980378
    %v55 = vadd.s32 %v45, 2147483648
    %vm57 = vcmp.ge.s32.totalorder %v55, 2576980378
    %v58 = vadd.s32 %v46, 2147483648
    %vm60 = vcmp.ge.s32.totalorder %v58, 2576980378
    %v61 = vadd.s32 %v47, 2147483648
    %vm63 = vcmp.ge.s32.totalorder %v61, 2576980378
    %v64 = vadd.s32 %v48, 2147483648
    %vm66 = vcmp.ge.s32.totalorder %v64, 2576980378
    %v67 = vadd.s32 %v49, 2147483648
    %vm69 = vcmp.ge.s32.totalorder %v67, 2576980378
    %v70 = vadd.s32 %v50, 2147483648
    %vm72 = vcmp.ge.s32.totalorder %v70, 2576980378
    %v73 = vadd.s32 %v51, 2147483648
    %vm75 = vcmp.ge.s32.totalorder %v73, 2576980378
    %v76 = vld [vmem:[#allocation2] sm:$0xff]
    %v77 = vld [vmem:[#allocation2 + $0x8] sm:$0xff]
    %v78 = vld [vmem:[#allocation2 + $0x10] sm:$0xff]
    %v79 = vld [vmem:[#allocation2 + $0x18] sm:$0xff]
    %v80 = vld [vmem:[#allocation2 + $0x20] sm:$0xff]
    %v81 = vld [vmem:[#allocation2 + $0x28] sm:$0xff]
    %v82 = vld [vmem:[#allocation2 + $0x30] sm:$0xff]
    %v83 = vld [vmem:[#allocation2 + $0x38] sm:$0xff]
    %v84 = vmul.f32 %v76, 1.1111112
    %v85 = vmul.f32 %v77, 1.1111112
    %v86 = vmul.f32 %v78, 1.1111112
    %v87 = vmul.f32 %v79, 1.1111112
    %v88 = vmul.f32 %v80, 1.1111112
    %v89 = vmul.f32 %v81, 1.1111112
    %v90 = vmul.f32 %v82, 1.1111112
    %v91 = vmul.f32 %v83, 1.1111112
    %v92 = vsel %vm54, %v84, 0.0
    %v93 = vsel %vm57, %v85, 0.0
    %v94 = vsel %vm60, %v86, 0.0
    %v95 = vsel %vm63, %v87, 0.0
    %v96 = vsel %vm66, %v88, 0.0
    %v97 = vsel %vm69, %v89, 0.0
    %v98 = vsel %vm72, %v90, 0.0
    %v99 = vsel %vm75, %v91, 0.0
    %100 = vst [vmem:[#allocation7] sm:$0xff] %v92
    %101 = vst [vmem:[#allocation7 + $0x8] sm:$0xff] %v93
    %102 = vst [vmem:[#allocation7 + $0x10] sm:$0xff] %v94
    %103 = vst [vmem:[#allocation7 + $0x18] sm:$0xff] %v95
    %104 = vst [vmem:[#allocation7 + $0x20] sm:$0xff] %v96
    %105 = vst [vmem:[#allocation7 + $0x28] sm:$0xff] %v97
    %106 = vst [vmem:[#allocation7 + $0x30] sm:$0xff] %v98
    %107 = vst [vmem:[#allocation7 + $0x38] sm:$0xff] %v99
    // Predicated region
    $region18: #{tpu_custom_call.1} parent=1 // pred_check
      _
    $region19: #{tpu_custom_call.1} parent=1 // pred_check_branch
      %109 = sbr.rel (0) target = $region21
    $region20: #{tpu_custom_call.1} parent=1 // pred_region
      %111 = vsyncadd [#allocation4], 0
      %s112 = sshll.u32 [#allocation7], 4
      %s113 = int_to_ptr.vmem [resolvable:$true] %s112
      %s114 = sshll.u32 %s2, 4
      %s115 = int_to_ptr.hbm [resolvable:$true] %s114
      %120 = dma.vmem_to_hbm [thread:$0]  %s113, 1024, %s115, [#allocation4], 512, 512, 32
    $region21: #{tpu_custom_call.1} parent=1 // pred_fallthru
      _
    // Predicated region
    $region22: #{tpu_custom_call.1} parent=1 // pred_check
      _
    $region23: #{tpu_custom_call.1} parent=1 // pred_check_branch
      %122 = sbr.rel (0) target = $region25
    $region24: #{tpu_custom_call.1} parent=1 // pred_region
      %124 = dma.done [#allocation4], 1024
    $region25: #{tpu_custom_call.1} parent=1 // pred_fallthru
      _
    %125 = vsyncpa [#allocation3], 1
    %126 = vsyncpa [#allocation6], 1
    %127 = vsyncpa [#allocation4], 1

</llo_original>
